<compile_context>
chip_gen: v5e
topology: v5e:2x2
jax: 0.10.0
libtpu: 0.0.40
codegen_flags: <defaults>
</compile_context>

<pallas_src>
import functools

import jax
import jax.numpy as jnp
from jax.experimental import pallas as pl
from jax.experimental.pallas import tpu as pltpu


def _banded_conv_weights(w_hwio, W):
    """Fold 3x3 taps + width zero-padding into banded matmul weights.

    w_hwio : (3, 3, Cin, Cout)
    returns: (3, W*Cin, W*Cout) with
        B[dy, wi*Cin+ci, wo*Cout+co] = w[dy, wi-wo+1, ci, co]  if |wi-wo| <= 1
                                       0                       otherwise
    so a lane-dense row slab (.., W*Cin) @ B[dy] gives one dy-tap's conv
    contribution for a whole output row; width padding is implicit.
    """
    kh, kw, Cin, Cout = w_hwio.shape
    wi = jnp.arange(W)[:, None]
    wo = jnp.arange(W)[None, :]
    dx = wi - wo + 1                                  # tap index along width
    valid = (dx >= 0) & (dx < kw)
    dx_c = jnp.clip(dx, 0, kw - 1)
    taps = w_hwio[:, dx_c, :, :]                      # (kh, W, W, Cin, Cout)
    taps = taps * valid[None, :, :, None, None].astype(w_hwio.dtype)
    taps = jnp.transpose(taps, (0, 1, 3, 2, 4))       # (kh, W, Cin, W, Cout)
    return taps.reshape(kh, W * Cin, W * Cout)


def _row_shift_matrices(nb, H, dtype):
    """(2, R, R) matrices: [0] picks row r-1, [1] picks row r+1 (zero across
    image boundaries inside a multi-image block)."""
    R = nb * H
    r = jnp.arange(R)[:, None]
    c = jnp.arange(R)[None, :]
    same_img = (r // H) == (c // H)
    s_prev = (r == c + 1) & same_img
    s_next = (r == c - 1) & same_img
    return jnp.stack([s_prev, s_next]).astype(dtype)


def _vdsr_gated_kernel(x_ref, s_ref, w_ref, m_ref, o_ref, *, nb, H, Kw, Nw):
    """One block of `nb` images per grid step; everything lane-dense.

    x_ref : (nb, H, Kw)   f32 input slab, Kw = W*Cin lanes
    s_ref : (2, R, R)     row-shift matrices, R = nb*H
    w_ref : (3*Kw, Nw)    banded 3x3 weights (dy-major), Nw = W*Cout
    m_ref : (1, Nw)       per-output-channel gate tiled over W (f32)
    o_ref : (nb, H, Nw)   gated + ReLU'd conv output
    """
    R = nb * H
    xc = x_ref[...].reshape(R, Kw).astype(w_ref.dtype)
    # dy = 0 / 2 row halos via tiny MXU shift-matmuls (exact row copies, zero
    # rows at image boundaries) -- no jnp.pad, no unaligned sublane slices.
    x_prev = jnp.dot(s_ref[0], xc,
                     preferred_element_type=jnp.float32).astype(xc.dtype)
    x_next = jnp.dot(s_ref[1], xc,
                     preferred_element_type=jnp.float32).astype(xc.dtype)
    # All 9 taps fused into one lane-dense matmul: (R, 3*Kw) @ (3*Kw, Nw).
    patch = jnp.concatenate([x_prev, xc, x_next], axis=1)
    acc = jnp.dot(patch, w_ref[...], preferred_element_type=jnp.float32)
    y = jnp.maximum(acc * m_ref[...], 0.0)            # gate (>=0) + ReLU, f32
    o_ref[...] = y.reshape(nb, H, Nw).astype(o_ref.dtype)


def _pick_block_n(N):
    # Batch several images per step (amortize ~0.35us/step overhead) but keep
    # >= 2 grid steps so both v7x TensorCores have work.
    for bn in (8, 4, 2):
        if N % bn == 0 and N // bn >= 2:
            return bn
    return 1


def conv3x3_gated_relu_nhwc(x_nhwc, w_hwio, mask, *,
                            compute_dtype=jnp.bfloat16, block_n=None):
    """3x3 conv (stride 1, pad 1, no bias) * per-channel gate, then ReLU."""
    N, H, W, Cin = x_nhwc.shape
    kh, kw, _, Cout = w_hwio.shape
    assert (kh, kw) == (3, 3)
    Kw, Nw = W * Cin, W * Cout
    if block_n is None:
        block_n = _pick_block_n(N)
    R = block_n * H

    x2d = x_nhwc.astype(jnp.float32).reshape(N, H, Kw)         # free reshape
    shifts = _row_shift_matrices(block_n, H, compute_dtype)    # (2, R, R)
    wb = _banded_conv_weights(w_hwio.astype(jnp.float32), W)
    wb = wb.reshape(3 * Kw, Nw).astype(compute_dtype)          # (3*Kw, Nw)
    m2d = jnp.tile(mask.astype(jnp.float32).reshape(1, Cout), (1, W))  # (1,Nw)

    kernel = functools.partial(_vdsr_gated_kernel,
                               nb=block_n, H=H, Kw=Kw, Nw=Nw)
    y2d = pl.pallas_call(
        kernel,
        out_shape=jax.ShapeDtypeStruct((N, H, Nw), x_nhwc.dtype),
        grid_spec=pltpu.PrefetchScalarGridSpec(
            num_scalar_prefetch=0,
            grid=(N // block_n,),
            in_specs=[
                pl.BlockSpec((block_n, H, Kw), lambda n: (n, 0, 0)),
                pl.BlockSpec((2, R, R), lambda n: (0, 0, 0)),
                pl.BlockSpec((3 * Kw, Nw), lambda n: (0, 0)),
                pl.BlockSpec((1, Nw), lambda n: (0, 0)),
            ],
            out_specs=pl.BlockSpec((block_n, H, Nw), lambda n: (n, 0, 0)),
        ),
        compiler_params=pltpu.CompilerParams(
            dimension_semantics=("parallel",),
            vmem_limit_bytes=32 * 1024 * 1024),
    )(x2d, shifts, wb, m2d)
    return y2d.reshape(N, H, W, Cout)


class VDSRLayerGated:
    """JAX/Pallas re-implementation of the gated VDSR layer.

    __call__(x_nchw, tau, noise, reuse_prob) ->
        (relu(gated_conv(x)), prob, p0, flops)  -- same tuple as PyTorch.
    """

    def __init__(self, in_planes=8, out_planes=8, key=None):
        if key is None:
            key = jax.random.PRNGKey(0)
        k_w, k_a = jax.random.split(key)
        self.in_planes = in_planes
        self.out_planes = out_planes
        fan_in = 3 * 3 * in_planes
        self.weight = (jax.random.normal(k_w, (3, 3, in_planes, out_planes),
                                         dtype=jnp.float32)
                       * (2.0 / fan_in) ** 0.5)
        # TODO(synk): exact dnas.Conv2d gumbel-gating internals are not in the
        # provided source; approximated as a softmax over channel-count
        # candidates with an expected per-channel keep mask + expected FLOPs.
        self.candidates = jnp.array(
            [max(out_planes // 4, 1), max(out_planes // 2, 1),
             max(3 * out_planes // 4, 1), out_planes], dtype=jnp.float32)
        self.alpha = 0.01 * jax.random.normal(
            k_a, (self.candidates.shape[0],), dtype=jnp.float32)

    def _gate(self, tau):
        p0 = jax.nn.softmax(self.alpha / tau)
        ch_idx = jnp.arange(self.out_planes, dtype=jnp.float32)
        keep = (ch_idx[None, :] < self.candidates[:, None]).astype(jnp.float32)
        mask = jnp.sum(p0[:, None] * keep, axis=0)     # (Cout,), nonnegative
        return p0, mask

    def forward_nhwc(self, x_nhwc, tau=1.0, noise=False, reuse_prob=None):
        # noise=False (eval) path; gumbel noise not modeled (see TODO above).
        prob = reuse_prob
        N, H, W, Cin = x_nhwc.shape
        assert Cin == self.in_planes
        p0, mask = self._gate(tau)
        y_nhwc = conv3x3_gated_relu_nhwc(x_nhwc, self.weight, mask)
        exp_out = jnp.sum(p0 * self.candidates)
        exp_in = (jnp.float32(self.in_planes) if prob is None
                  else jnp.sum(prob * self.candidates))
        flops = exp_in * exp_out * 9.0 * H * W
        return y_nhwc, prob, p0, flops

    def __call__(self, x_nchw, tau=1.0, noise=False, reuse_prob=None):
        # NCHW boundary for parity with the PyTorch module; callers that hold
        # NHWC activations should use forward_nhwc() and skip both transposes.
        x_nhwc = jnp.transpose(x_nchw, (0, 2, 3, 1))
        y_nhwc, prob, p0, flops = self.forward_nhwc(x_nhwc, tau, noise,
                                                    reuse_prob)
        return jnp.transpose(y_nhwc, (0, 3, 1, 2)), prob, p0, flops


if __name__ == "__main__":
    key = jax.random.PRNGKey(0)
    k_x, k_m = jax.random.split(key)

    N, C, Hs, Ws = 2, 8, 16, 16            # W*C = 128 -> fully lane-dense
    x = jax.random.normal(k_x, (N, C, Hs, Ws), dtype=jnp.float32)

    layer = VDSRLayerGated(in_planes=C, out_planes=C, key=k_m)
    y, prob, p0, flops = layer(x, tau=1.0, noise=False, reuse_prob=None)
    jax.block_until_ready(y)
    jax.block_until_ready(p0)
    jax.block_until_ready(flops)

    # Reference: f32 conv (HIGHEST precision) on bf16-rounded operands (the
    # kernel feeds bf16 operands to the MXU with f32 accumulation), then the
    # same gate + ReLU in f32.
    p0_ref = jax.nn.softmax(layer.alpha / 1.0)
    ch_idx = jnp.arange(C, dtype=jnp.float32)
    keep = (ch_idx[None, :] < layer.candidates[:, None]).astype(jnp.float32)
    mask_ref = jnp.sum(p0_ref[:, None] * keep, axis=0)
    x_r = x.astype(jnp.bfloat16).astype(jnp.float32)
    w_r = layer.weight.astype(jnp.bfloat16).astype(jnp.float32)
    y_ref = jax.lax.conv_general_dilated(
        x_r, jnp.transpose(w_r, (3, 2, 0, 1)),          # OIHW
        window_strides=(1, 1), padding=((1, 1), (1, 1)),
        dimension_numbers=("NCHW", "OIHW", "NCHW"),
        precision=jax.lax.Precision.HIGHEST)
    y_ref = jnp.maximum(y_ref * mask_ref[None, :, None, None], 0.0)
    assert jnp.allclose(y, y_ref, atol=2e-3, rtol=2e-3), "mismatch vs reference"

    print("KERNEL_OK")
</pallas_src>

<mosaic_0001>
module attributes {stable_mosaic.version = 11 : i64} {
  func.func @_vdsr_gated_kernel(%arg0: i32, %arg1: memref<1x16x128xf32, #tpu.memory_space<vmem>>, %arg2: memref<2x16x16xbf16, #tpu.memory_space<vmem>>, %arg3: memref<384x128xbf16, #tpu.memory_space<vmem>>, %arg4: memref<1x128xf32, #tpu.memory_space<vmem>>, %arg5: memref<1x16x128xf32, #tpu.memory_space<vmem>>) attributes {dimension_semantics = [#tpu.dimension_semantics<parallel>], iteration_bounds = array<i64: 2>, scalar_prefetch = 0 : i64, scratch_operands = 0 : i64, tpu.core_type = #tpu.core_type<tc>, window_params = [{transform_indices = @transform_0, window_bounds = array<i64: 1, 16, 128>}, {pipeline_mode = #tpu.pipeline_mode<synchronous>, transform_indices = @transform_1, window_bounds = array<i64: 2, 16, 16>}, {pipeline_mode = #tpu.pipeline_mode<synchronous>, transform_indices = @transform_2, window_bounds = array<i64: 384, 128>}, {pipeline_mode = #tpu.pipeline_mode<synchronous>, transform_indices = @transform_3, window_bounds = array<i64: 1, 128>}, {transform_indices = @transform_4, window_bounds = array<i64: 1, 16, 128>}]} {
    %c0 = arith.constant 0 : index
    %c0_0 = arith.constant 0 : index
    %c0_1 = arith.constant 0 : index
    %0 = vector.load %arg1[%c0, %c0_0, %c0_1] : memref<1x16x128xf32, #tpu.memory_space<vmem>>, vector<1x16x128xf32>
    %1 = vector.shape_cast %0 : vector<1x16x128xf32> to vector<16x128xf32>
    %2 = arith.truncf %1 : vector<16x128xf32> to vector<16x128xbf16>
    %c0_2 = arith.constant 0 : index
    %c0_3 = arith.constant 0 : index
    %c0_4 = arith.constant 0 : index
    %3 = vector.load %arg2[%c0_2, %c0_3, %c0_4] : memref<2x16x16xbf16, #tpu.memory_space<vmem>>, vector<1x16x16xbf16>
    %4 = vector.shape_cast %3 : vector<1x16x16xbf16> to vector<16x16xbf16>
    %cst = arith.constant dense<0.000000e+00> : vector<16x128xf32>
    %5 = tpu.matmul %4, %2, %cst {dimension_numbers = #tpu.dot_dimension_numbers<[1], [0], [0], [1], [0, 0, 1, 1], [], []>} : vector<16x16xbf16>, vector<16x128xbf16>, vector<16x128xf32> -> vector<16x128xf32>
    %6 = arith.truncf %5 : vector<16x128xf32> to vector<16x128xbf16>
    %c1 = arith.constant 1 : index
    %c0_5 = arith.constant 0 : index
    %c0_6 = arith.constant 0 : index
    %7 = vector.load %arg2[%c1, %c0_5, %c0_6] : memref<2x16x16xbf16, #tpu.memory_space<vmem>>, vector<1x16x16xbf16>
    %8 = vector.shape_cast %7 : vector<1x16x16xbf16> to vector<16x16xbf16>
    %cst_7 = arith.constant dense<0.000000e+00> : vector<16x128xf32>
    %9 = tpu.matmul %8, %2, %cst_7 {dimension_numbers = #tpu.dot_dimension_numbers<[1], [0], [0], [1], [0, 0, 1, 1], [], []>} : vector<16x16xbf16>, vector<16x128xbf16>, vector<16x128xf32> -> vector<16x128xf32>
    %10 = arith.truncf %9 : vector<16x128xf32> to vector<16x128xbf16>
    %11 = tpu.concatenate %6, %2, %10 in 1 : vector<16x128xbf16>, vector<16x128xbf16>, vector<16x128xbf16> -> vector<16x384xbf16>
    %c0_8 = arith.constant 0 : index
    %c0_9 = arith.constant 0 : index
    %12 = vector.load %arg3[%c0_8, %c0_9] : memref<384x128xbf16, #tpu.memory_space<vmem>>, vector<384x128xbf16>
    %cst_10 = arith.constant dense<0.000000e+00> : vector<16x128xf32>
    %13 = tpu.matmul %11, %12, %cst_10 {dimension_numbers = #tpu.dot_dimension_numbers<[1], [0], [0], [1], [0, 0, 1, 1], [], []>} : vector<16x384xbf16>, vector<384x128xbf16>, vector<16x128xf32> -> vector<16x128xf32>
    %c0_11 = arith.constant 0 : index
    %c0_12 = arith.constant 0 : index
    %14 = vector.load %arg4[%c0_11, %c0_12] : memref<1x128xf32, #tpu.memory_space<vmem>>, vector<1x128xf32>
    %15 = vector.broadcast %14 : vector<1x128xf32> to vector<16x128xf32>
    %16 = arith.mulf %13, %15 : vector<16x128xf32>
    %cst_13 = arith.constant 0.000000e+00 : f32
    %17 = vector.broadcast %cst_13 : f32 to vector<16x128xf32>
    %18 = arith.maximumf %16, %17 : vector<16x128xf32>
    %19 = vector.shape_cast %18 : vector<16x128xf32> to vector<1x16x128xf32>
    %c0_14 = arith.constant 0 : index
    %c0_15 = arith.constant 0 : index
    %c0_16 = arith.constant 0 : index
    %20 = vector.load %arg5[%c0_14, %c0_15, %c0_16] : memref<1x16x128xf32, #tpu.memory_space<vmem>>, vector<1x16x128xf32>
    tpu.vector_store %arg5[%c0_14, %c0_15, %c0_16], %19 {strides = array<i32>} : memref<1x16x128xf32, #tpu.memory_space<vmem>>, vector<1x16x128xf32>,
    return
  }
  func.func @transform_0(%arg0: i32) -> (i32, i32, i32) {
    %c0_i32 = arith.constant 0 : i32
    %c0_i32_0 = arith.constant 0 : i32
    %c0_i32_1 = arith.constant 0 : i32
    return %arg0, %c0_i32, %c0_i32_0 : i32, i32, i32
  }
  func.func @transform_1(%arg0: i32) -> (i32, i32, i32) {
    %c0_i32 = arith.constant 0 : i32
    %c0_i32_0 = arith.constant 0 : i32
    %c0_i32_1 = arith.constant 0 : i32
    %c0_i32_2 = arith.constant 0 : i32
    return %c0_i32, %c0_i32_0, %c0_i32_1 : i32, i32, i32
  }
  func.func @transform_2(%arg0: i32) -> (i32, i32) {
    %c0_i32 = arith.constant 0 : i32
    %c0_i32_0 = arith.constant 0 : i32
    %c0_i32_1 = arith.constant 0 : i32
    return %c0_i32, %c0_i32_0 : i32, i32
  }
  func.func @transform_3(%arg0: i32) -> (i32, i32) {
    %c0_i32 = arith.constant 0 : i32
    %c0_i32_0 = arith.constant 0 : i32
    %c0_i32_1 = arith.constant 0 : i32
    return %c0_i32, %c0_i32_0 : i32, i32
  }
  func.func @transform_4(%arg0: i32) -> (i32, i32, i32) {
    %c0_i32 = arith.constant 0 : i32
    %c0_i32_0 = arith.constant 0 : i32
    %c0_i32_1 = arith.constant 0 : i32
    return %arg0, %c0_i32, %c0_i32_0 : i32, i32, i32
  }
}

</mosaic_0001>

<llo_original>
// kernel: tpu_custom_call.1
$region0: #{tpu_custom_call.1}
  #allocation0 [shape = 'u32[]', space=smem, size = 0x4, offset = 0x4, fixed_abs, tag = 'smem constant byte address 0x4 - core index']
  #allocation1 [shape = 'u32[72,128]{1,0:T(1,128)}', space=vmem, size = 0x9000, scoped, tag = 'internal scratch']
  %s0 = inlined_call_operand.hbm [shape: f32[2,16,128], index: 0, kind: input, shape index: {}]
  %s1 = inlined_call_operand.hbm [shape: bf16[2,16,16], index: 1, kind: input, shape index: {}]
  %s2 = inlined_call_operand.hbm [shape: bf16[384,128], index: 2, kind: input, shape index: {}]
  %s3 = inlined_call_operand.vmem [shape: f32[1,128], index: 3, kind: input, shape index: {}]
  %s4 = inlined_call_operand.hbm [shape: f32[2,16,128], index: 4, kind: output, shape index: {}]
  %s5 = sld [smem:[#allocation0]]
  $region61: #{tpu_custom_call.1} parent=0
    _
  %s7 = ssub.s32 1, %s5
  %s8 = scalar_select 0, %s7, %s5
  $region1: #{tpu_custom_call.1} parent=0
    #allocation2 [shape = 'u8[16384]{0}', space=vmem, size = 0x4000, scoped, tag = 'input window, operand 0']
    #allocation3 [shape = 's32[2]{0}', space=sflag, size = 0x8, scoped, tag = 'scoped memory for tpu_custom_call.1']
    #allocation4 [shape = 's32[2]{0}', space=sflag, size = 0x8, scoped, tag = 'scoped memory for tpu_custom_call.1']
    #allocation5 [shape = 'u8[8192]{0}', space=vmem, size = 0x2000, scoped, tag = 'input window, operand 1, single buffered']
    #allocation6 [shape = 's32[1]{0}', space=sflag, size = 0x4, scoped, tag = 'scoped memory for tpu_custom_call.1']
    #allocation7 [shape = 'u8[98304]{0}', space=vmem, size = 0x18000, scoped, tag = 'input window, operand 2, single buffered']
    #allocation8 [shape = 'u8[16384]{0}', space=vmem, size = 0x4000, scoped, tag = 'output window, operand 0']
    %9 = vsyncpa [#allocation3], 0
    %s10 = scalar_lea.sflag [#allocation3], 1
    %11 = vsyncpa %s10, 0
    %12 = vsyncpa [#allocation6], 0
    %13 = vsyncpa [#allocation4], 0
    %s14 = scalar_lea.sflag [#allocation4], 1
    %15 = vsyncpa %s14, 0
    loop: start=0, step=1, limit=4
    $region2: #{tpu_custom_call.1} parent=1 // loop_pre_header
      _
    $region3: #{tpu_custom_call.1} parent=1 // loop_header
      %s17 = sphi 0, %s21
      %p18 = scmp.ge.s32.totalorder %s17, 4
      %s27 = sphi 0, %s29
      %s30 = sphi 0, %s27
      %s31 = sphi 0, %s30
      %s47 = sphi 0, %s31
      %s51 = sphi 0, %s51
      %s53 = sphi 0, %s51
      %s54 = sphi 0, %s53
      %s68 = sphi 0, %s54
      %s72 = sphi 0, %s72
      %s74 = sphi 0, %s72
      %s75 = sphi 0, %s74
      %s89 = sphi 0, %s75
      %s93 = sphi 0, %s93
      %s95 = sphi 0, %s93
      %s96 = sphi 0, %s95
      %s110 = sphi 0, %s96
      %s116 = sphi 0, %s118
      %s119 = sphi 0, %s116
      %s120 = sphi 0, %s119
      %s136 = sphi 0, %s120
    $region4: #{tpu_custom_call.1} parent=1 // loop_header_branch
      %20 = sbr.rel (%p18) target = $region8
    $region5: #{tpu_custom_call.1} parent=1 // loop_body
      %s22 = ssub.s32 %s17, 1
      %s23 = ssub.s32 %s17, 2
      %s24 = sadd.s32 %s17, 1
      %s25 = ssub.s32 %s17, %s24
      %p26 = scmp.eq.s32.totalorder %s25, 0
      %s28 = sadd.s32 %s27, 1
      %s29 = scalar_select %p26, %s27, %s28
      %p32 = pneg %p26
      %p33 = scmp.eq.s32.totalorder %s17, 1
      %p34 = por %p32, %p33
      %p35 = scmp.ne.s32.totalorder %s27, %s30
      %p36 = scmp.eq.s32.totalorder %s17, 0
      %p37 = por %p35, %p36
      %p38 = scmp.ne.s32.totalorder %s27, %s30
      %p39 = scmp.eq.s32.totalorder %s22, 1
      %p40 = por %p38, %p39
      %p41 = scmp.ne.s32.totalorder %s30, %s31
      %p42 = scmp.eq.s32.totalorder %s22, 0
      %p43 = por %p41, %p42
      %p44 = scmp.ne.s32.totalorder %s30, %s31
      %p45 = scmp.eq.s32.totalorder %s23, 1
      %p46 = por %p44, %p45
      %p48 = scmp.ne.s32.totalorder %s31, %s47
      %p49 = scmp.eq.s32.totalorder %s23, 0
      %p50 = por %p48, %p49
      %s52 = sadd.s32 %s51, 1
      %p55 = scmp.eq.s32.totalorder %s17, 1
      %p56 = scmp.ne.s32.totalorder %s51, %s53
      %p57 = scmp.eq.s32.totalorder %s17, 0
      %p58 = por %p56, %p57
      %p59 = scmp.ne.s32.totalorder %s51, %s53
      %p60 = scmp.eq.s32.totalorder %s22, 1
      %p61 = por %p59, %p60
      %p62 = scmp.ne.s32.totalorder %s53, %s54
      %p63 = scmp.eq.s32.totalorder %s22, 0
      %p64 = por %p62, %p63
      %p65 = scmp.ne.s32.totalorder %s53, %s54
      %p66 = scmp.eq.s32.totalorder %s23, 1
      %p67 = por %p65, %p66
      %p69 = scmp.ne.s32.totalorder %s54, %s68
      %p70 = scmp.eq.s32.totalorder %s23, 0
      %p71 = por %p69, %p70
      %s73 = sadd.s32 %s72, 1
      %p76 = scmp.eq.s32.totalorder %s17, 1
      %p77 = scmp.ne.s32.totalorder %s72, %s74
      %p78 = scmp.eq.s32.totalorder %s17, 0
      %p79 = por %p77, %p78
      %p80 = scmp.ne.s32.totalorder %s72, %s74
      %p81 = scmp.eq.s32.totalorder %s22, 1
      %p82 = por %p80, %p81
      %p83 = scmp.ne.s32.totalorder %s74, %s75
      %p84 = scmp.eq.s32.totalorder %s22, 0
      %p85 = por %p83, %p84
      %p86 = scmp.ne.s32.totalorder %s74, %s75
      %p87 = scmp.eq.s32.totalorder %s23, 1
      %p88 = por %p86, %p87
      %p90 = scmp.ne.s32.totalorder %s75, %s89
      %p91 = scmp.eq.s32.totalorder %s23, 0
      %p92 = por %p90, %p91
      %s94 = sadd.s32 %s93, 1
      %p97 = scmp.eq.s32.totalorder %s17, 1
      %p98 = scmp.ne.s32.totalorder %s93, %s95
      %p99 = scmp.eq.s32.totalorder %s17, 0
      %p100 = por %p98, %p99
      %p101 = scmp.ne.s32.totalorder %s93, %s95
      %p102 = scmp.eq.s32.totalorder %s22, 1
      %p103 = por %p101, %p102
      %p104 = scmp.ne.s32.totalorder %s95, %s96
      %p105 = scmp.eq.s32.totalorder %s22, 0
      %p106 = por %p104, %p105
      %p107 = scmp.ne.s32.totalorder %s95, %s96
      %p108 = scmp.eq.s32.totalorder %s23, 1
      %p109 = por %p107, %p108
      %p111 = scmp.ne.s32.totalorder %s96, %s110
      %p112 = scmp.eq.s32.totalorder %s23, 0
      %p113 = por %p111, %p112
      %s114 = ssub.s32 %s17, %s24
      %p115 = scmp.eq.s32.totalorder %s114, 0
      %s117 = sadd.s32 %s116, 1
      %s118 = scalar_select %p115, %s116, %s117
      %p121 = pneg %p115
      %p122 = scmp.eq.s32.totalorder %s17, 1
      %p123 = por %p121, %p122
      %p124 = scmp.ne.s32.totalorder %s116, %s119
      %p125 = scmp.eq.s32.totalorder %s17, 0
      %p126 = por %p124, %p125
      %p127 = scmp.ne.s32.totalorder %s116, %s119
      %p128 = scmp.eq.s32.totalorder %s22, 1
      %p129 = por %p127, %p128
      %p130 = scmp.ne.s32.totalorder %s119, %s120
      %p131 = scmp.eq.s32.totalorder %s22, 0
      %p132 = por %p130, %p131
      %p133 = scmp.ne.s32.totalorder %s119, %s120
      %p134 = scmp.eq.s32.totalorder %s23, 1
      %p135 = por %p133, %p134
      %p137 = scmp.ne.s32.totalorder %s120, %s136
      %p138 = scmp.eq.s32.totalorder %s23, 0
      %p139 = por %p137, %p138
      %p140 = scmp.le.s32.totalorder 1, %s17
      %p141 = scmp.lt.s32.totalorder %s17, 3
      %p142 = pnand %p140, %p141
      %p143 = pneg %p142
      // Predicated region
      $region9: #{tpu_custom_call.1} parent=5 // pred_check
        _
      $region10: #{tpu_custom_call.1} parent=5 // pred_check_branch
        %145 = sbr.rel (%p142) target = $region12
      $region11: #{tpu_custom_call.1} parent=5 // pred_region
        %s146 = ssub.s32 %s17, 1
        // Predicated region
        $region13: #{tpu_custom_call.1} parent=11 // pred_check
          %p147 = pneg %p64
        $region14: #{tpu_custom_call.1} parent=11 // pred_check_branch
          %149 = sbr.rel (%p147) target = $region16
        $region15: #{tpu_custom_call.1} parent=11 // pred_region
          %151 = vsyncadd [#allocation6], 0
          %s152 = sshll.u32 %s1, 4
          %s153 = int_to_ptr.hbm [resolvable:$true] %s152
          %s154 = sshll.u32 [#allocation5], 4
          %s155 = int_to_ptr.vmem [resolvable:$true] %s154
          %160 = dma.hbm_to_vmem [thread:$0]  %s153, 256, %s155, [#allocation6], 64, 64, 4
        $region16: #{tpu_custom_call.1} parent=11 // pred_fallthru
          _
        // Predicated region
        $region17: #{tpu_custom_call.1} parent=11 // pred_check
          %p161 = pneg %p85
        $region18: #{tpu_custom_call.1} parent=11 // pred_check_branch
          %163 = sbr.rel (%p161) target = $region20
        $region19: #{tpu_custom_call.1} parent=11 // pred_region
          %165 = vsyncadd [#allocation6], 0
          %s166 = sshll.u32 %s2, 4
          %s167 = int_to_ptr.hbm [resolvable:$true] %s166
          %s168 = sshll.u32 [#allocation7], 4
          %s169 = int_to_ptr.vmem [resolvable:$true] %s168
          %174 = dma.hbm_to_vmem [thread:$0]  %s167, 3072, %s169, [#allocation6], 64, 64, 4
        $region20: #{tpu_custom_call.1} parent=11 // pred_fallthru
          _
        // Predicated region
        $region21: #{tpu_custom_call.1} parent=11 // pred_check
          %p175 = pneg %p106
        $region22: #{tpu_custom_call.1} parent=11 // pred_check_branch
          %177 = sbr.rel (%p175) target = $region24
        $region23: #{tpu_custom_call.1} parent=11 // pred_region
          _
        $region24: #{tpu_custom_call.1} parent=11 // pred_fallthru
          _
      $region12: #{tpu_custom_call.1} parent=5 // pred_fallthru
        _
      %p178 = scmp.lt.s32.totalorder %s17, 2
      // Predicated region
      $region25: #{tpu_custom_call.1} parent=5 // pred_check
        %p179 = pneg %p178
      $region26: #{tpu_custom_call.1} parent=5 // pred_check_branch
        %181 = sbr.rel (%p179) target = $region28
      $region27: #{tpu_custom_call.1} parent=5 // pred_region
        // Predicated region
        $region29: #{tpu_custom_call.1} parent=27 // pred_check
          %p182 = pneg %p37
        $region30: #{tpu_custom_call.1} parent=27 // pred_check_branch
          %184 = sbr.rel (%p182) target = $region32
        $region31: #{tpu_custom_call.1} parent=27 // pred_region
          %s185 = sand.u32 %s27, 1
          %s186 = scalar_lea.sflag [#allocation3], %s185
          %s187 = sand.u32 %s27, 1
          %s188 = smul.addr %s187, 16
          %s189 = scalar_lea.vmem [#allocation2], %s188
          %191 = vsyncadd %s186, 0
          %s192 = smul.addr %s17, 2
          %s193 = smul.addr %s192, 8
          %s194 = scalar_lea.hbm %s0, %s193
          %s195 = sshll.u32 %s194, 4
          %s196 = int_to_ptr.hbm [resolvable:$true] %s195
          %s197 = sshll.u32 %s189, 4
          %s198 = int_to_ptr.vmem [resolvable:$true] %s197
          %203 = dma.hbm_to_vmem [thread:$0]  %s196, 256, %s198, %s186, 128, 128, 8
        $region32: #{tpu_custom_call.1} parent=27 // pred_fallthru
          _
      $region28: #{tpu_custom_call.1} parent=5 // pred_fallthru
        _
      %p204 = scmp.le.s32.totalorder 1, %s17
      %p205 = scmp.lt.s32.totalorder %s17, 3
      %p206 = pnand %p204, %p205
      %p207 = pneg %p206
      // Predicated region
      $region33: #{tpu_custom_call.1} parent=5 // pred_check
        _
      $region34: #{tpu_custom_call.1} parent=5 // pred_check_branch
        %209 = sbr.rel (%p206) target = $region36
      $region35: #{tpu_custom_call.1} parent=5 // pred_region
        %s210 = ssub.s32 %s17, 1
        %s211 = sand.u32 %s30, 1
        %s212 = scalar_lea.sflag [#allocation3], %s211
        %s213 = sand.u32 %s30, 1
        %s214 = smul.addr %s213, 16
        %s215 = scalar_lea.vmem [#allocation2], %s214
        // Predicated region
        $region37: #{tpu_custom_call.1} parent=35 // pred_check
          %p216 = pneg %p43
        $region38: #{tpu_custom_call.1} parent=35 // pred_check_branch
          %218 = sbr.rel (%p216) target = $region40
        $region39: #{tpu_custom_call.1} parent=35 // pred_region
          %220 = dma.done %s212, 256
        $region40: #{tpu_custom_call.1} parent=35 // pred_fallthru
          _
        // Predicated region
        $region41: #{tpu_custom_call.1} parent=35 // pred_check
          %p221 = pneg %p64
        $region42: #{tpu_custom_call.1} parent=35 // pred_check_branch
          %223 = sbr.rel (%p221) target = $region44
        $region43: #{tpu_custom_call.1} parent=35 // pred_region
          %225 = dma.done [#allocation6], 256
        $region44: #{tpu_custom_call.1} parent=35 // pred_fallthru
          _
        // Predicated region
        $region45: #{tpu_custom_call.1} parent=35 // pred_check
          %p226 = pneg %p85
        $region46: #{tpu_custom_call.1} parent=35 // pred_check_branch
          %228 = sbr.rel (%p226) target = $region48
        $region47: #{tpu_custom_call.1} parent=35 // pred_region
          %230 = dma.done [#allocation6], 3072
        $region48: #{tpu_custom_call.1} parent=35 // pred_fallthru
          _
        %s231 = sand.u32 %s30, 1
        %s232 = scalar_lea.sflag [#allocation3], %s231
        %s233 = sand.u32 %s30, 1
        %s234 = smul.addr %s233, 16
        %s235 = scalar_lea.vmem [#allocation2], %s234
        %p236 = pneg %p43
        %p237 = pneg %p40
        %p238 = pneg %p64
        %p239 = pneg %p61
        %p240 = pneg %p85
        %p241 = pneg %p82
        %p242 = pneg %p106
        %p243 = pneg %p103
        %p244 = pneg %p132
        %p245 = pneg %p129
        %s246 = sand.u32 %s119, 1
        %s247 = scalar_lea.sflag [#allocation4], %s246
        %s248 = sand.u32 %s119, 1
        %s249 = smul.addr %s248, 16
        %s250 = scalar_lea.vmem [#allocation8], %s249
        %v252 = vld [vmem:[%s215] sm:$0xff]
        %v253 = vld [vmem:[%s215 + $0x8] sm:$0xff]
        %v254 = vpack.c.bf16 %v252, %v252
        %v255 = vpack.c.bf16 %v253, %v253
        %v256 = vld [vmem:[#allocation5] sm:$0xf]
        %v257 = vld [vmem:[#allocation5 + $0x4] sm:$0xf]
        %v260 = vunpack.c.l.b16 %v256
        %v261 = vunpack.c.l.b16 %v257
        %v262 = vpack.c.b16 %v261, %v260
        %v265 = vunpack.c.l.b16 %v254
        %v266 = vunpack.c.l.b16 %v255
        %v267 = vpack.c.b16 %v266, %v265
        %vm269 = vcmask 130048
        %v271 = vsel %vm269, %v262, 0
        %273 = vmatpush.bf16.msra.mxu0 0
        %274 = vmatpush.bf16.msra.mxu0 0
        %275 = vmatpush.bf16.msra.mxu0 0
        %276 = vmatpush.bf16.msra.mxu0 0
        %277 = vmatpush.bf16.msra.mxu0 0
        %278 = vmatpush.bf16.msra.mxu0 0
        %279 = vmatpush.bf16.msra.mxu0 0
        %280 = vmatpush.bf16.msra.mxu0 %v267
        %281 = vmatmul.bf16.gmra.mxu0 %v271
        %v282 = vpop.f32.mrf.mxu0
        %v283 = vadd.f32 0.0, %v282
        %v284 = vpop.f32.mrf.mxu0
        %v285 = vadd.f32 0.0, %v284
        %286 = vdwg.mxu0
        %v287 = vpack.c.bf16 %v283, %v283
        %v288 = vpack.c.bf16 %v285, %v285
        %s289 = scalar_lea.vmem [#allocation5], 8
        %v290 = vld [vmem:[%s289] sm:$0xf]
        %v291 = vld [vmem:[%s289 + $0x4] sm:$0xf]
        %v294 = vunpack.c.l.b16 %v290
        %v295 = vunpack.c.l.b16 %v291
        %v296 = vpack.c.b16 %v295, %v294
        %v298 = vsel %vm269, %v296, 0
        %300 = vmatpush.bf16.msra.mxu0 0
        %301 = vmatpush.bf16.msra.mxu0 0
        %302 = vmatpush.bf16.msra.mxu0 0
        %303 = vmatpush.bf16.msra.mxu0 0
        %304 = vmatpush.bf16.msra.mxu0 0
        %305 = vmatpush.bf16.msra.mxu0 0
        %306 = vmatpush.bf16.msra.mxu0 0
        %307 = vmatpush.bf16.msra.mxu0 %v267
        %308 = vmatmul.bf16.gmra.mxu0 %v298
        %v309 = vpop.f32.mrf.mxu0
        %v310 = vadd.f32 0.0, %v309
        %v311 = vpop.f32.mrf.mxu0
        %v312 = vadd.f32 0.0, %v311
        %313 = vdwg.mxu0
        %v314 = vpack.c.bf16 %v310, %v310
        %v315 = vpack.c.bf16 %v312, %v312
        %v318 = vunpack.c.l.b16 %v287
        %v319 = vunpack.c.l.b16 %v288
        %v320 = vpack.c.b16 %v319, %v318
        %v324 = vunpack.c.l.b16 %v314
        %v325 = vunpack.c.l.b16 %v315
        %v326 = vpack.c.b16 %v325, %v324
        %v328 = vld [vmem:[#allocation7] sm:$0xf]
        %v329 = vld [vmem:[#allocation7 + $0x4] sm:$0xf]
        %v330 = vld [vmem:[#allocation7 + $0x8] sm:$0xf]
        %v331 = vld [vmem:[#allocation7 + $0xc] sm:$0xf]
        %v332 = vld [vmem:[#allocation7 + $0x10] sm:$0xf]
        %v333 = vld [vmem:[#allocation7 + $0x14] sm:$0xf]
        %v334 = vld [vmem:[#allocation7 + $0x18] sm:$0xf]
        %v335 = vld [vmem:[#allocation7 + $0x1c] sm:$0xf]
        %v336 = vld [vmem:[#allocation7 + $0x20] sm:$0xf]
        %v337 = vld [vmem:[#allocation7 + $0x24] sm:$0xf]
        %v338 = vld [vmem:[#allocation7 + $0x28] sm:$0xf]
        %v339 = vld [vmem:[#allocation7 + $0x2c] sm:$0xf]
        %v340 = vld [vmem:[#allocation7 + $0x30] sm:$0xf]
        %v341 = vld [vmem:[#allocation7 + $0x34] sm:$0xf]
        %v342 = vld [vmem:[#allocation7 + $0x38] sm:$0xf]
        %v343 = vld [vmem:[#allocation7 + $0x3c] sm:$0xf]
        %v344 = vld [vmem:[#allocation7 + $0x40] sm:$0xf]
        %v345 = vld [vmem:[#allocation7 + $0x44] sm:$0xf]
        %v346 = vld [vmem:[#allocation7 + $0x48] sm:$0xf]
        %v347 = vld [vmem:[#allocation7 + $0x4c] sm:$0xf]
        %v348 = vld [vmem:[#allocation7 + $0x50] sm:$0xf]
        %v349 = vld [vmem:[#allocation7 + $0x54] sm:$0xf]
        %v350 = vld [vmem:[#allocation7 + $0x58] sm:$0xf]
        %v351 = vld [vmem:[#allocation7 + $0x5c] sm:$0xf]
        %v352 = vld [vmem:[#allocation7 + $0x60] sm:$0xf]
        %v353 = vld [vmem:[#allocation7 + $0x64] sm:$0xf]
        %v354 = vld [vmem:[#allocation7 + $0x68] sm:$0xf]
        %v355 = vld [vmem:[#allocation7 + $0x6c] sm:$0xf]
        %v356 = vld [vmem:[#allocation7 + $0x70] sm:$0xf]
        %v357 = vld [vmem:[#allocation7 + $0x74] sm:$0xf]
        %v358 = vld [vmem:[#allocation7 + $0x78] sm:$0xf]
        %v359 = vld [vmem:[#allocation7 + $0x7c] sm:$0xf]
        %v360 = vld [vmem:[#allocation7 + $0x80] sm:$0xf]
        %v361 = vld [vmem:[#allocation7 + $0x84] sm:$0xf]
        %v362 = vld [vmem:[#allocation7 + $0x88] sm:$0xf]
        %v363 = vld [vmem:[#allocation7 + $0x8c] sm:$0xf]
        %v364 = vld [vmem:[#allocation7 + $0x90] sm:$0xf]
        %v365 = vld [vmem:[#allocation7 + $0x94] sm:$0xf]
        %v366 = vld [vmem:[#allocation7 + $0x98] sm:$0xf]
        %v367 = vld [vmem:[#allocation7 + $0x9c] sm:$0xf]
        %v368 = vld [vmem:[#allocation7 + $0xa0] sm:$0xf]
        %v369 = vld [vmem:[#allocation7 + $0xa4] sm:$0xf]
        %v370 = vld [vmem:[#allocation7 + $0xa8] sm:$0xf]
        %v371 = vld [vmem:[#allocation7 + $0xac] sm:$0xf]
        %v372 = vld [vmem:[#allocation7 + $0xb0] sm:$0xf]
        %v373 = vld [vmem:[#allocation7 + $0xb4] sm:$0xf]
        %v374 = vld [vmem:[#allocation7 + $0xb8] sm:$0xf]
        %v375 = vld [vmem:[#allocation7 + $0xbc] sm:$0xf]
        %v424 = vunpack.c.l.b16 %v328
        %v425 = vunpack.c.l.b16 %v329
        %v426 = vunpack.c.l.b16 %v330
        %v427 = vunpack.c.l.b16 %v331
        %v428 = vunpack.c.l.b16 %v332
        %v429 = vunpack.c.l.b16 %v333
        %v430 = vunpack.c.l.b16 %v334
        %v431 = vunpack.c.l.b16 %v335
        %v432 = vunpack.c.l.b16 %v336
        %v433 = vunpack.c.l.b16 %v337
        %v434 = vunpack.c.l.b16 %v338
        %v435 = vunpack.c.l.b16 %v339
        %v436 = vunpack.c.l.b16 %v340
        %v437 = vunpack.c.l.b16 %v341
        %v438 = vunpack.c.l.b16 %v342
        %v439 = vunpack.c.l.b16 %v343
        %v440 = vunpack.c.l.b16 %v344
        %v441 = vunpack.c.l.b16 %v345
        %v442 = vunpack.c.l.b16 %v346
        %v443 = vunpack.c.l.b16 %v347
        %v444 = vunpack.c.l.b16 %v348
        %v445 = vunpack.c.l.b16 %v349
        %v446 = vunpack.c.l.b16 %v350
        %v447 = vunpack.c.l.b16 %v351
        %v448 = vunpack.c.l.b16 %v352
        %v449 = vunpack.c.l.b16 %v353
        %v450 = vunpack.c.l.b16 %v354
        %v451 = vunpack.c.l.b16 %v355
        %v452 = vunpack.c.l.b16 %v356
        %v453 = vunpack.c.l.b16 %v357
        %v454 = vunpack.c.l.b16 %v358
        %v455 = vunpack.c.l.b16 %v359
        %v456 = vunpack.c.l.b16 %v360
        %v457 = vunpack.c.l.b16 %v361
        %v458 = vunpack.c.l.b16 %v362
        %v459 = vunpack.c.l.b16 %v363
        %v460 = vunpack.c.l.b16 %v364
        %v461 = vunpack.c.l.b16 %v365
        %v462 = vunpack.c.l.b16 %v366
        %v463 = vunpack.c.l.b16 %v367
        %v464 = vunpack.c.l.b16 %v368
        %v465 = vunpack.c.l.b16 %v369
        %v466 = vunpack.c.l.b16 %v370
        %v467 = vunpack.c.l.b16 %v371
        %v468 = vunpack.c.l.b16 %v372
        %v469 = vunpack.c.l.b16 %v373
        %v470 = vunpack.c.l.b16 %v374
        %v471 = vunpack.c.l.b16 %v375
        %v472 = vpack.c.b16 %v425, %v424
        %v473 = vpack.c.b16 %v427, %v426
        %v474 = vpack.c.b16 %v429, %v428
        %v475 = vpack.c.b16 %v431, %v430
        %v476 = vpack.c.b16 %v433, %v432
        %v477 = vpack.c.b16 %v435, %v434
        %v478 = vpack.c.b16 %v437, %v436
        %v479 = vpack.c.b16 %v439, %v438
        %v480 = vpack.c.b16 %v441, %v440
        %v481 = vpack.c.b16 %v443, %v442
        %v482 = vpack.c.b16 %v445, %v444
        %v483 = vpack.c.b16 %v447, %v446
        %v484 = vpack.c.b16 %v449, %v448
        %v485 = vpack.c.b16 %v451, %v450
        %v486 = vpack.c.b16 %v453, %v452
        %v487 = vpack.c.b16 %v455, %v454
        %v488 = vpack.c.b16 %v457, %v456
        %v489 = vpack.c.b16 %v459, %v458
        %v490 = vpack.c.b16 %v461, %v460
        %v491 = vpack.c.b16 %v463, %v462
        %v492 = vpack.c.b16 %v465, %v464
        %v493 = vpack.c.b16 %v467, %v466
        %v494 = vpack.c.b16 %v469, %v468
        %v495 = vpack.c.b16 %v471, %v470
        %520 = vmatpush.bf16.msra.mxu0 %v479
        %521 = vmatpush.bf16.msra.mxu0 %v478
        %522 = vmatpush.bf16.msra.mxu0 %v477
        %523 = vmatpush.bf16.msra.mxu0 %v476
        %524 = vmatpush.bf16.msra.mxu0 %v475
        %525 = vmatpush.bf16.msra.mxu0 %v474
        %526 = vmatpush.bf16.msra.mxu0 %v473
        %527 = vmatpush.bf16.msra.mxu0 %v472
        %528 = vmatmul.bf16.gmra.mxu0 %v320
        %v529 = vpop.f32.mrf.mxu0
        %v530 = vadd.f32 0.0, %v529
        %v531 = vpop.f32.mrf.mxu0
        %v532 = vadd.f32 0.0, %v531
        %533 = vdwg.mxu0
        %534 = vmatpush.bf16.msra.mxu0 %v487
        %535 = vmatpush.bf16.msra.mxu0 %v486
        %536 = vmatpush.bf16.msra.mxu0 %v485
        %537 = vmatpush.bf16.msra.mxu0 %v484
        %538 = vmatpush.bf16.msra.mxu0 %v483
        %539 = vmatpush.bf16.msra.mxu0 %v482
        %540 = vmatpush.bf16.msra.mxu0 %v481
        %541 = vmatpush.bf16.msra.mxu0 %v480
        %542 = vmatmul.bf16.gmra.mxu0 %v267
        %v543 = vpop.f32.mrf.mxu0
        %v544 = vadd.f32 %v530, %v543
        %v545 = vpop.f32.mrf.mxu0
        %v546 = vadd.f32 %v532, %v545
        %547 = vdwg.mxu0
        %548 = vmatpush.bf16.msra.mxu0 %v495
        %549 = vmatpush.bf16.msra.mxu0 %v494
        %550 = vmatpush.bf16.msra.mxu0 %v493
        %551 = vmatpush.bf16.msra.mxu0 %v492
        %552 = vmatpush.bf16.msra.mxu0 %v491
        %553 = vmatpush.bf16.msra.mxu0 %v490
        %554 = vmatpush.bf16.msra.mxu0 %v489
        %555 = vmatpush.bf16.msra.mxu0 %v488
        %556 = vmatmul.bf16.gmra.mxu0 %v326
        %v557 = vpop.f32.mrf.mxu0
        %v558 = vadd.f32 %v544, %v557
        %v559 = vpop.f32.mrf.mxu0
        %v560 = vadd.f32 %v546, %v559
        %561 = vdwg.mxu0
        %v562 = vld [vmem:[%s3] sm:$0x1]
        %v564 = vperm.slane %v562, 0
        %v566 = vmul.f32 %v558, %v564
        %v567 = vmul.f32 %v560, %v564
        %v568 = vmax.f32 %v566, 0.0
        %v569 = vmax.f32 %v567, 0.0
        %570 = vst [vmem:[%s250] sm:$0xff] %v568
        %571 = vst [vmem:[%s250 + $0x8] sm:$0xff] %v569
        %s572 = sand.u32 %s119, 1
        %s573 = scalar_lea.sflag [#allocation4], %s572
        %s574 = sand.u32 %s119, 1
        %s575 = smul.addr %s574, 16
        %s576 = scalar_lea.vmem [#allocation8], %s575
        // Predicated region
        $region49: #{tpu_custom_call.1} parent=35 // pred_check
          %p577 = pneg %p129
        $region50: #{tpu_custom_call.1} parent=35 // pred_check_branch
          %579 = sbr.rel (%p577) target = $region52
        $region51: #{tpu_custom_call.1} parent=35 // pred_region
          %581 = vsyncadd %s573, 0
          %s582 = smul.addr %s22, 2
          %s583 = smul.addr %s582, 8
          %s584 = scalar_lea.hbm %s4, %s583
          %s585 = sshll.u32 %s576, 4
          %s586 = int_to_ptr.vmem [resolvable:$true] %s585
          %s587 = sshll.u32 %s584, 4
          %s588 = int_to_ptr.hbm [resolvable:$true] %s587
          %593 = dma.vmem_to_hbm [thread:$0]  %s586, 256, %s588, %s573, 128, 128, 8
        $region52: #{tpu_custom_call.1} parent=35 // pred_fallthru
          _
      $region36: #{tpu_custom_call.1} parent=5 // pred_fallthru
        _
      %p594 = scmp.le.s32.totalorder 2, %s17
      // Predicated region
      $region53: #{tpu_custom_call.1} parent=5 // pred_check
        %p595 = pneg %p594
      $region54: #{tpu_custom_call.1} parent=5 // pred_check_branch
        %597 = sbr.rel (%p595) target = $region56
      $region55: #{tpu_custom_call.1} parent=5 // pred_region
        %s598 = ssub.s32 %s17, 2
        // Predicated region
        $region57: #{tpu_custom_call.1} parent=55 // pred_check
          %p599 = pneg %p135
        $region58: #{tpu_custom_call.1} parent=55 // pred_check_branch
          %601 = sbr.rel (%p599) target = $region60
        $region59: #{tpu_custom_call.1} parent=55 // pred_region
          %s602 = sand.u32 %s120, 1
          %s603 = scalar_lea.sflag [#allocation4], %s602
          %s604 = sand.u32 %s120, 1
          %s605 = smul.addr %s604, 16
          %s606 = scalar_lea.vmem [#allocation8], %s605
          %608 = dma.done %s603, 256
        $region60: #{tpu_custom_call.1} parent=55 // pred_fallthru
          _
      $region56: #{tpu_custom_call.1} parent=5 // pred_fallthru
        _
    $region6: #{tpu_custom_call.1} parent=1 // loop_footer
      %s21 = sadd.s32 1, %s17
    $region7: #{tpu_custom_call.1} parent=1 // loop_footer_branch
      %16 = sbr.rel target = $region3
    $region8: #{tpu_custom_call.1} parent=1 // loop_exit
      _
    %609 = vsyncpa [#allocation3], 1
    %s610 = scalar_lea.sflag [#allocation3], 1
    %611 = vsyncpa %s610, 1
    %612 = vsyncpa [#allocation6], 1
    %613 = vsyncpa [#allocation4], 1
    %s614 = scalar_lea.sflag [#allocation4], 1
    %615 = vsyncpa %s614, 1

</llo_original>
